<compile_context>
chip_gen: v6e
topology: v6e:2x2x1
jax: 0.10.0
libtpu: 0.0.40
codegen_flags: <defaults>
</compile_context>

<pallas_src>
import functools

import jax
import jax.numpy as jnp
from jax.experimental import pallas as pl
from jax.experimental.pallas import tpu as pltpu

F = 45  # raw feature width: [user_id, item_id, age, gender(2), occ(21), movie(19)]


# ----------------------------------------------------------------------------
# Pallas kernel (transposed: batch on lanes)
# ----------------------------------------------------------------------------
def make_widedeep_kernel(n_dnn, h0):
    def kernel(*refs):
        slab_ref, wstack_ref, blT_ref = refs[:3]
        dnn_refs = refs[3:3 + 2 * n_dnn]
        wd_ref = refs[3 + 2 * n_dnn]          # SMEM (1,1): w_out[1]
        out_ref = refs[4 + 2 * n_dnn]

        dot = functools.partial(jnp.dot, preferred_element_type=jnp.float32)

        # Single stacked first-layer matmul:
        #   rows[:h0]   = deep Linear(5E+1 -> H0) with the one-hot/multi-hot
        #                 feature "embedding" matmuls folded into the weight.
        #   rows[h0]    = w_out[0]*wide_output + b_out (wide Linear folded,
        #                 per-example user/item bias enters via the slab row).
        rows = dot(wstack_ref[...], slab_ref[...])        # (H0+1, TB), f32

        h = rows[:h0] + blT_ref[...]                      # (H0, TB)
        for li in range(n_dnn):                           # DNN: Linear + ReLU
            w = dnn_refs[2 * li][...]
            b = dnn_refs[2 * li + 1][...]
            h = jnp.maximum(dot(w, h) + b, 0.0)           # (H_last=1, TB)

        # logit = w_out[0]*wide + b_out  +  w_out[1]*deep
        logit = rows[h0:h0 + 1] + wd_ref[0, 0] * h
        out_ref[...] = jax.nn.sigmoid(logit)              # (1, TB) lane-dense

    return kernel


# ----------------------------------------------------------------------------
# Wrapper: jit-fused glue (gathers, slab stacking, transpose) + pallas_call
# ----------------------------------------------------------------------------
def _default_tile_b(batch):
    # Memory-bound kernel: large lane tiles amortize the ~0.35 us/step grid
    # overhead.  Cap at 8192 (~2 MB f32 slab/step, double-buffered well under
    # v7x's 64 MiB VMEM) while keeping the grid >= 2 steps for megacore
    # sharding once the batch is large enough.
    tb = pl.next_power_of_2(max(pl.cdiv(batch, 2), 256))
    return int(min(tb, 8192))


@functools.partial(jax.jit, static_argnames=("tile_b", "use_bf16"))
def widedeep_forward(x, params, *, tile_b=None, use_bf16=False):
    B = x.shape[0]
    if tile_b is None:
        tile_b = _default_tile_b(B)
    G = pl.cdiv(B, tile_b)
    Bp = G * tile_b

    w_stack = params["w_stack"]                     # (H0+1, R_pad)
    blT = params["blT"]                             # (H0, 1)
    H0 = blT.shape[0]
    R_pad = w_stack.shape[1]

    # ---- glue (fused by jit): gathers, stacked slab, pad, transpose --------
    idx_u = x[:, 0].astype(jnp.int32)
    idx_i = x[:, 1].astype(jnp.int32)
    ue = params["user_emb"][idx_u]                  # (B, E)
    ie = params["item_emb"][idx_i]                  # (B, E)
    # Per-example wide bias, pre-scaled by w_out[0], constants folded in.
    wb = (params["user_bias_s"][idx_u] + params["item_bias_s"][idx_i]
          + params["bias_const"])                   # (B, 1)

    # One slab per example: [x[:,2:] (43), ue (E), ie (E), wb (1)] -> R_pad.
    slab = jnp.concatenate([x[:, 2:], ue, ie, wb], axis=1)
    slab = jnp.pad(slab, ((0, Bp - B), (0, R_pad - slab.shape[1])))
    slabT = slab.T                                  # (R_pad, Bp), batch on lanes
    if use_bf16:
        slabT = slabT.astype(jnp.bfloat16)          # halve HBM bytes (v6e/v7x)

    dnn_T = params["dnn_T"]
    n_dnn = len(dnn_T)
    dnn_flat = []
    for wT, bT in dnn_T:
        dnn_flat += [wT, bT]

    def resident(a):    # weights: same block every step -> stays in VMEM
        return pl.BlockSpec(a.shape, lambda i: (0, 0))

    in_specs = [pl.BlockSpec((R_pad, tile_b), lambda i: (0, i)),   # slab
                resident(w_stack), resident(blT)]
    in_specs += [resident(a) for a in dnn_flat]
    in_specs += [pl.BlockSpec(memory_space=pltpu.MemorySpace.SMEM)]  # wd scalar

    out = pl.pallas_call(
        make_widedeep_kernel(n_dnn, H0),
        out_shape=jax.ShapeDtypeStruct((1, Bp), jnp.float32),
        grid=(G,),
        in_specs=in_specs,
        out_specs=pl.BlockSpec((1, tile_b), lambda i: (0, i)),
        compiler_params=pltpu.CompilerParams(
            dimension_semantics=("parallel",),
            vmem_limit_bytes=48 * 1024 * 1024,
        ),
    )(slabT, w_stack, blT, *dnn_flat, params["wd"])

    return out.reshape(-1, 1)[:B]                   # (B, 1)


# ----------------------------------------------------------------------------
# Deterministic parameter construction (synthetic init, no checkpoint load)
# ----------------------------------------------------------------------------
def xavier_normal(key, shape):
    fan_out, fan_in = shape[0], shape[1]
    std = (2.0 / (fan_in + fan_out)) ** 0.5
    return std * jax.random.normal(key, shape, dtype=jnp.float32)


def prepare_kernel_params(p, E, H0):
    """Fold / transpose the raw parameters into kernel-ready arrays."""
    w_lin = p["w_lin"]                              # (5E+1, H0), stored (in,out)
    wl_u = w_lin[0:E]
    wl_i = w_lin[E:2 * E]
    wl_age = w_lin[2 * E:2 * E + 1]                 # (1, H0)
    wl_g = w_lin[2 * E + 1:3 * E + 1]
    wl_o = w_lin[3 * E + 1:4 * E + 1]
    wl_m = w_lin[4 * E + 1:5 * E + 1]

    wout_wide = p["w_out"][0, 0]
    bias_const = wout_wide * p["b_wide"][0, 0] + p["b_out"][0, 0]

    # Slab row layout: [x[:,2:] (43), ue (E), ie (E), wb (1)], padded to R_pad.
    R = 43 + 2 * E + 1
    R_pad = ((R + 7) // 8) * 8

    # Deep rows: fold the one-hot/multi-hot "embedding" matmuls into weights
    # acting directly on the raw features, then append the embedding weights.
    wd_feat = jnp.concatenate([
        wl_age,                        # age
        p["gender_w"] @ wl_g,          # (2, H0)
        p["occ_w"] @ wl_o,             # (21, H0)
        p["movie_w"] @ wl_m,           # (19, H0)
    ], axis=0)                         # (43, H0)
    w_deep_in = jnp.concatenate([wd_feat, wl_u, wl_i], axis=0)   # (43+2E, H0)
    w_deep = jnp.zeros((R_pad, H0), jnp.float32).at[:43 + 2 * E].set(w_deep_in).T

    # Wide row: w_out[0] * Linear(43->1) on the raw features + 1.0 on the wb row
    # (which already carries w_out[0]*(user_bias+item_bias+b_wide) + b_out).
    w_wide_row = jnp.zeros((1, R_pad), jnp.float32)
    w_wide_row = w_wide_row.at[0, 0:43].set(wout_wide * p["w_wide"][:, 0])
    w_wide_row = w_wide_row.at[0, 43 + 2 * E].set(1.0)

    w_stack = jnp.concatenate([w_deep, w_wide_row], axis=0)      # (H0+1, R_pad)

    return {
        "w_stack": w_stack,
        "blT": p["b_lin"].T,                        # (H0, 1)
        "dnn_T": [(w.T, b.T) for w, b in p["dnn"]],
        "wd": p["w_out"][1:2, 0:1],                 # (1, 1) = w_out[1]
        "bias_const": bias_const,                   # scalar
        "user_bias_s": wout_wide * p["user_bias"],
        "item_bias_s": wout_wide * p["item_bias"],
    }


def init_params(key, num_users, num_items, hidden_units, embedding_dim):
    E = embedding_dim
    H0 = hidden_units[0]
    ks = jax.random.split(key, 16)

    user_emb = xavier_normal(ks[0], (num_users, E))
    item_emb = xavier_normal(ks[1], (num_items, E))
    gender_w = xavier_normal(ks[2], (2, E))
    occ_w = xavier_normal(ks[3], (21, E))
    movie_w = xavier_normal(ks[4], (19, E))
    user_bias = xavier_normal(ks[5], (num_users, 1))
    item_bias = xavier_normal(ks[6], (num_items, 1))

    # self.linear: Linear(5E+1, H0), stored (in, out).
    w_lin = xavier_normal(ks[7], (5 * E + 1, H0))
    b_lin = 0.01 * jax.random.normal(ks[8], (1, H0), dtype=jnp.float32)

    # DNN stack.
    dnn = []
    kd = jax.random.split(ks[9], len(hidden_units) - 1)
    for li, (di, do) in enumerate(zip(hidden_units[:-1], hidden_units[1:])):
        w = xavier_normal(kd[li], (di, do))
        b = jnp.zeros((1, do), dtype=jnp.float32)
        dnn.append((w, b))

    # Wide: Linear(43, 1); Output: Linear(2, 1).
    w_wide = xavier_normal(ks[10], (43, 1))
    b_wide = 0.01 * jax.random.normal(ks[11], (1, 1), dtype=jnp.float32)
    w_out = xavier_normal(ks[12], (2, 1))
    b_out = 0.01 * jax.random.normal(ks[13], (1, 1), dtype=jnp.float32)

    p = {
        "user_emb": user_emb, "item_emb": item_emb,
        "gender_w": gender_w, "occ_w": occ_w, "movie_w": movie_w,
        "user_bias": user_bias, "item_bias": item_bias,
        "w_lin": w_lin, "b_lin": b_lin, "dnn": dnn,
        "w_wide": w_wide, "b_wide": b_wide, "w_out": w_out, "b_out": b_out,
    }
    p.update(prepare_kernel_params(p, E, H0))
    return p


# ----------------------------------------------------------------------------
# Pure-JAX reference (mirrors the PyTorch forward exactly)
# ----------------------------------------------------------------------------
def reference_forward(x, p):
    idx_u = x[:, 0].astype(jnp.int32)
    idx_i = x[:, 1].astype(jnp.int32)
    ue = p["user_emb"][idx_u]
    ie = p["item_emb"][idx_i]
    age = x[:, 2:3]
    ge = x[:, 3:5] @ p["gender_w"]
    oe = x[:, 5:26] @ p["occ_w"]
    me = x[:, 26:45] @ p["movie_w"]
    deep = jnp.concatenate([ue, ie, age, ge, oe, me], axis=1)
    h = deep @ p["w_lin"] + p["b_lin"]
    for w, b in p["dnn"]:
        h = jnp.maximum(h @ w + b, 0.0)
    wide = p["user_bias"][idx_u] + p["item_bias"][idx_i] \
        + x[:, 2:] @ p["w_wide"] + p["b_wide"]
    comb = jnp.concatenate([wide, h], axis=1)
    return jax.nn.sigmoid(comb @ p["w_out"] + p["b_out"])


# ----------------------------------------------------------------------------
if __name__ == "__main__":
    num_users, num_items = 10, 20
    embedding_dim = 8
    hidden_units = [32, 16, 1]   # last hidden must be 1 (output is Linear(2,1))
    B = 4

    key = jax.random.PRNGKey(0)
    kp, kx = jax.random.split(key)
    params = init_params(kp, num_users, num_items, hidden_units, embedding_dim)

    # Deterministic synthetic input x of shape (B, 45).
    k1, k2, k3, k4, k5, k6 = jax.random.split(kx, 6)
    user_ids = jax.random.randint(k1, (B,), 0, num_users).astype(jnp.float32)
    item_ids = jax.random.randint(k2, (B,), 0, num_items).astype(jnp.float32)
    age = jax.random.uniform(k3, (B,), minval=18.0, maxval=65.0)
    gender_oh = jax.nn.one_hot(jax.random.randint(k4, (B,), 0, 2), 2,
                               dtype=jnp.float32)
    occ_oh = jax.nn.one_hot(jax.random.randint(k5, (B,), 0, 21), 21,
                            dtype=jnp.float32)
    movie_mh = jax.random.bernoulli(k6, 0.3, (B, 19)).astype(jnp.float32)
    x = jnp.concatenate([user_ids[:, None], item_ids[:, None], age[:, None],
                         gender_oh, occ_oh, movie_mh], axis=1)  # (B, 45)

    ref = reference_forward(x, params)

    # f32 path: tight check against the reference.
    out = jax.block_until_ready(widedeep_forward(x, params))
    assert out.shape == (B, 1) and out.dtype == jnp.float32
    assert jnp.allclose(out, ref, rtol=1e-3, atol=1e-3), (out, ref)

    # bf16-slab path (v6e/v7x HBM-traffic recommendation): looser tolerance.
    out_bf16 = jax.block_until_ready(widedeep_forward(x, params, use_bf16=True))
    assert out_bf16.shape == (B, 1) and out_bf16.dtype == jnp.float32
    assert jnp.allclose(out_bf16, ref, rtol=2e-2, atol=2e-2), (out_bf16, ref)

    print("KERNEL_OK")
</pallas_src>

<mosaic_0001>
module attributes {stable_mosaic.version = 11 : i64} {
  func.func @kernel(%arg0: i32, %arg1: memref<64x256xf32, #tpu.memory_space<vmem>>, %arg2: memref<33x64xf32, #tpu.memory_space<vmem>>, %arg3: memref<32x1xf32, #tpu.memory_space<vmem>>, %arg4: memref<16x32xf32, #tpu.memory_space<vmem>>, %arg5: memref<16x1xf32, #tpu.memory_space<vmem>>, %arg6: memref<1x16xf32, #tpu.memory_space<vmem>>, %arg7: memref<1x1xf32, #tpu.memory_space<vmem>>, %arg8: memref<1x1xf32, #tpu.memory_space<smem>>, %arg9: memref<1x256xf32, #tpu.memory_space<vmem>>) attributes {dimension_semantics = [#tpu.dimension_semantics<parallel>], iteration_bounds = array<i64: 1>, scalar_prefetch = 0 : i64, scratch_operands = 0 : i64, tpu.core_type = #tpu.core_type<tc>, window_params = [{transform_indices = @transform_0, window_bounds = array<i64: 64, 256>}, {pipeline_mode = #tpu.pipeline_mode<synchronous>, transform_indices = @transform_1, window_bounds = array<i64: 33, 64>}, {pipeline_mode = #tpu.pipeline_mode<synchronous>, transform_indices = @transform_2, window_bounds = array<i64: 32, 1>}, {pipeline_mode = #tpu.pipeline_mode<synchronous>, transform_indices = @transform_3, window_bounds = array<i64: 16, 32>}, {pipeline_mode = #tpu.pipeline_mode<synchronous>, transform_indices = @transform_4, window_bounds = array<i64: 16, 1>}, {pipeline_mode = #tpu.pipeline_mode<synchronous>, transform_indices = @transform_5, window_bounds = array<i64: 1, 16>}, {pipeline_mode = #tpu.pipeline_mode<synchronous>, transform_indices = @transform_6, window_bounds = array<i64: 1, 1>}, {transform_indices = @transform_7, window_bounds = array<i64: 1, 1>}, {transform_indices = @transform_8, window_bounds = array<i64: 1, 256>}]} {
    %c0 = arith.constant 0 : index
    %c0_0 = arith.constant 0 : index
    %0 = vector.load %arg2[%c0, %c0_0] : memref<33x64xf32, #tpu.memory_space<vmem>>, vector<33x64xf32>
    %c0_1 = arith.constant 0 : index
    %c0_2 = arith.constant 0 : index
    %1 = vector.load %arg1[%c0_1, %c0_2] : memref<64x256xf32, #tpu.memory_space<vmem>>, vector<64x256xf32>
    %cst = arith.constant dense<0.000000e+00> : vector<33x256xf32>
    %2 = tpu.matmul %0, %1, %cst {dimension_numbers = #tpu.dot_dimension_numbers<[1], [0], [0], [1], [0, 0, 1, 1], [], []>} : vector<33x64xf32>, vector<64x256xf32>, vector<33x256xf32> -> vector<33x256xf32>
    %3 = vector.extract_strided_slice %2 {offsets = [0, 0], sizes = [32, 256], strides = [1, 1]} : vector<33x256xf32> to vector<32x256xf32>
    %c0_3 = arith.constant 0 : index
    %c0_4 = arith.constant 0 : index
    %4 = vector.load %arg3[%c0_3, %c0_4] : memref<32x1xf32, #tpu.memory_space<vmem>>, vector<32x1xf32>
    %5 = vector.broadcast %4 : vector<32x1xf32> to vector<32x256xf32>
    %6 = arith.addf %3, %5 : vector<32x256xf32>
    %c0_5 = arith.constant 0 : index
    %c0_6 = arith.constant 0 : index
    %7 = vector.load %arg4[%c0_5, %c0_6] : memref<16x32xf32, #tpu.memory_space<vmem>>, vector<16x32xf32>
    %c0_7 = arith.constant 0 : index
    %c0_8 = arith.constant 0 : index
    %8 = vector.load %arg5[%c0_7, %c0_8] : memref<16x1xf32, #tpu.memory_space<vmem>>, vector<16x1xf32>
    %cst_9 = arith.constant dense<0.000000e+00> : vector<16x256xf32>
    %9 = tpu.matmul %7, %6, %cst_9 {dimension_numbers = #tpu.dot_dimension_numbers<[1], [0], [0], [1], [0, 0, 1, 1], [], []>} : vector<16x32xf32>, vector<32x256xf32>, vector<16x256xf32> -> vector<16x256xf32>
    %10 = vector.broadcast %8 : vector<16x1xf32> to vector<16x256xf32>
    %11 = arith.addf %9, %10 : vector<16x256xf32>
    %cst_10 = arith.constant 0.000000e+00 : f32
    %12 = vector.broadcast %cst_10 : f32 to vector<16x256xf32>
    %13 = arith.maximumf %11, %12 : vector<16x256xf32>
    %c0_11 = arith.constant 0 : index
    %c0_12 = arith.constant 0 : index
    %14 = vector.load %arg6[%c0_11, %c0_12] : memref<1x16xf32, #tpu.memory_space<vmem>>, vector<1x16xf32>
    %c0_13 = arith.constant 0 : index
    %c0_14 = arith.constant 0 : index
    %15 = vector.load %arg7[%c0_13, %c0_14] : memref<1x1xf32, #tpu.memory_space<vmem>>, vector<1x1xf32>
    %cst_15 = arith.constant dense<0.000000e+00> : vector<1x256xf32>
    %16 = tpu.matmul %14, %13, %cst_15 {dimension_numbers = #tpu.dot_dimension_numbers<[1], [0], [0], [1], [0, 0, 1, 1], [], []>} : vector<1x16xf32>, vector<16x256xf32>, vector<1x256xf32> -> vector<1x256xf32>
    %17 = vector.broadcast %15 : vector<1x1xf32> to vector<1x256xf32>
    %18 = arith.addf %16, %17 : vector<1x256xf32>
    %cst_16 = arith.constant 0.000000e+00 : f32
    %19 = vector.broadcast %cst_16 : f32 to vector<1x256xf32>
    %20 = arith.maximumf %18, %19 : vector<1x256xf32>
    %21 = vector.extract_strided_slice %2 {offsets = [32, 0], sizes = [1, 256], strides = [1, 1]} : vector<33x256xf32> to vector<1x256xf32>
    %c0_17 = arith.constant 0 : index
    %c0_18 = arith.constant 0 : index
    %22 = memref.load %arg8[%c0_17, %c0_18] : memref<1x1xf32, #tpu.memory_space<smem>>
    %23 = vector.broadcast %22 : f32 to vector<1x256xf32>
    %24 = arith.mulf %23, %20 : vector<1x256xf32>
    %25 = arith.addf %21, %24 : vector<1x256xf32>
    %26 = arith.negf %25 : vector<1x256xf32>
    %27 = math.exp %26 : vector<1x256xf32>
    %cst_19 = arith.constant 1.000000e+00 : f32
    %28 = vector.broadcast %cst_19 : f32 to vector<1x256xf32>
    %29 = arith.addf %28, %27 : vector<1x256xf32>
    %30 = arith.divf %28, %29 : vector<1x256xf32>
    %c0_20 = arith.constant 0 : index
    %c0_21 = arith.constant 0 : index
    %31 = vector.load %arg9[%c0_20, %c0_21] : memref<1x256xf32, #tpu.memory_space<vmem>>, vector<1x256xf32>
    tpu.vector_store %arg9[%c0_20, %c0_21], %30 {strides = array<i32>} : memref<1x256xf32, #tpu.memory_space<vmem>>, vector<1x256xf32>,
    return
  }
  func.func @transform_0(%arg0: i32) -> (i32, i32) {
    %c0_i32 = arith.constant 0 : i32
    %c0_i32_0 = arith.constant 0 : i32
    return %c0_i32, %arg0 : i32, i32
  }
  func.func @transform_1(%arg0: i32) -> (i32, i32) {
    %c0_i32 = arith.constant 0 : i32
    %c0_i32_0 = arith.constant 0 : i32
    %c0_i32_1 = arith.constant 0 : i32
    return %c0_i32, %c0_i32_0 : i32, i32
  }
  func.func @transform_2(%arg0: i32) -> (i32, i32) {
    %c0_i32 = arith.constant 0 : i32
    %c0_i32_0 = arith.constant 0 : i32
    %c0_i32_1 = arith.constant 0 : i32
    return %c0_i32, %c0_i32_0 : i32, i32
  }
  func.func @transform_3(%arg0: i32) -> (i32, i32) {
    %c0_i32 = arith.constant 0 : i32
    %c0_i32_0 = arith.constant 0 : i32
    %c0_i32_1 = arith.constant 0 : i32
    return %c0_i32, %c0_i32_0 : i32, i32
  }
  func.func @transform_4(%arg0: i32) -> (i32, i32) {
    %c0_i32 = arith.constant 0 : i32
    %c0_i32_0 = arith.constant 0 : i32
    %c0_i32_1 = arith.constant 0 : i32
    return %c0_i32, %c0_i32_0 : i32, i32
  }
  func.func @transform_5(%arg0: i32) -> (i32, i32) {
    %c0_i32 = arith.constant 0 : i32
    %c0_i32_0 = arith.constant 0 : i32
    %c0_i32_1 = arith.constant 0 : i32
    return %c0_i32, %c0_i32_0 : i32, i32
  }
  func.func @transform_6(%arg0: i32) -> (i32, i32) {
    %c0_i32 = arith.constant 0 : i32
    %c0_i32_0 = arith.constant 0 : i32
    %c0_i32_1 = arith.constant 0 : i32
    return %c0_i32, %c0_i32_0 : i32, i32
  }
  func.func @transform_7(%arg0: i32) -> (i32, i32) {
    %c0_i32 = arith.constant 0 : i32
    %c0_i32_0 = arith.constant 0 : i32
    %c0_i32_1 = arith.constant 0 : i32
    return %c0_i32, %c0_i32_0 : i32, i32
  }
  func.func @transform_8(%arg0: i32) -> (i32, i32) {
    %c0_i32 = arith.constant 0 : i32
    %c0_i32_0 = arith.constant 0 : i32
    return %c0_i32, %arg0 : i32, i32
  }
}

</mosaic_0001>

<llo_original>
// kernel: widedeep_forward.1
$region0: #{widedeep_forward.1}
  #allocation0 [shape = 'u32[]', space=smem, size = 0x4, offset = 0x4, fixed_abs, tag = 'smem constant byte address 0x4 - core index']
  #allocation1 [shape = 'u32[144,128]{1,0:T(1,128)}', space=vmem, size = 0x12000, scoped, tag = 'internal scratch']
  #allocation2 [shape = 'f32[1,1]{1,0:T(1,128)S(1)}', space=vmem, size = 0x200, scoped, tag = 'scoped memory for widedeep_forward.1']
  #allocation3 [shape = 'f32[1,1]{1,0:T(1,128)S(6)}', space=smem, size = 0x200, scoped, tag = 'scoped memory for widedeep_forward.1']
  %s0 = inlined_call_operand.vmem [shape: f32[64,256], index: 0, kind: input, shape index: {}]
  %s1 = inlined_call_operand.vmem [shape: f32[33,64], index: 1, kind: input, shape index: {}]
  %s2 = inlined_call_operand.vmem [shape: f32[32,1], index: 2, kind: input, shape index: {}]
  %s3 = inlined_call_operand.vmem [shape: f32[16,32], index: 3, kind: input, shape index: {}]
  %s4 = inlined_call_operand.vmem [shape: f32[16,1], index: 4, kind: input, shape index: {}]
  %s5 = inlined_call_operand.vmem [shape: f32[1,16], index: 5, kind: input, shape index: {}]
  %s6 = inlined_call_operand.<no memory space> [shape: f32[1,1], index: 6, kind: input, shape index: {}]
  %s7 = inlined_call_operand.<no memory space> [shape: f32[1,1], index: 7, kind: input, shape index: {}]
  %s8 = inlined_call_operand.vmem [shape: f32[1,256], index: 8, kind: output, shape index: {}]
  %s9 = sld [smem:[#allocation0]]
  $region42: #{widedeep_forward.1} parent=0
    _
  %s11 = ssub.s32 1, %s9
  %s12 = scalar_select 0, %s11, %s9
  %v13 = vstv %s6
  %14 = vst [vmem:[#allocation2] sm:$0x1] %v13
  %15 = sst [smem:[#allocation3]] %s7
  // Predicated region
  $region2: #{widedeep_forward.1} parent=0 // pred_check
    _
  $region3: #{widedeep_forward.1} parent=0 // pred_check_branch
    %17 = sbr.rel (0) target = $region5
  $region4: #{widedeep_forward.1} parent=0 // pred_region
    _
  $region5: #{widedeep_forward.1} parent=0 // pred_fallthru
    _
  // Predicated region
  $region6: #{widedeep_forward.1} parent=0 // pred_check
    _
  $region7: #{widedeep_forward.1} parent=0 // pred_check_branch
    %19 = sbr.rel (0) target = $region9
  $region8: #{widedeep_forward.1} parent=0 // pred_region
    _
  $region9: #{widedeep_forward.1} parent=0 // pred_fallthru
    _
  // Predicated region
  $region10: #{widedeep_forward.1} parent=0 // pred_check
    _
  $region11: #{widedeep_forward.1} parent=0 // pred_check_branch
    %21 = sbr.rel (0) target = $region13
  $region12: #{widedeep_forward.1} parent=0 // pred_region
    _
  $region13: #{widedeep_forward.1} parent=0 // pred_fallthru
    _
  // Predicated region
  $region14: #{widedeep_forward.1} parent=0 // pred_check
    _
  $region15: #{widedeep_forward.1} parent=0 // pred_check_branch
    %23 = sbr.rel (0) target = $region17
  $region16: #{widedeep_forward.1} parent=0 // pred_region
    _
  $region17: #{widedeep_forward.1} parent=0 // pred_fallthru
    _
  // Predicated region
  $region18: #{widedeep_forward.1} parent=0 // pred_check
    _
  $region19: #{widedeep_forward.1} parent=0 // pred_check_branch
    %25 = sbr.rel (0) target = $region21
  $region20: #{widedeep_forward.1} parent=0 // pred_region
    _
  $region21: #{widedeep_forward.1} parent=0 // pred_fallthru
    _
  // Predicated region
  $region22: #{widedeep_forward.1} parent=0 // pred_check
    _
  $region23: #{widedeep_forward.1} parent=0 // pred_check_branch
    %27 = sbr.rel (0) target = $region25
  $region24: #{widedeep_forward.1} parent=0 // pred_region
    _
  $region25: #{widedeep_forward.1} parent=0 // pred_fallthru
    _
  // Predicated region
  $region26: #{widedeep_forward.1} parent=0 // pred_check
    _
  $region27: #{widedeep_forward.1} parent=0 // pred_check_branch
    %29 = sbr.rel (0) target = $region29
  $region28: #{widedeep_forward.1} parent=0 // pred_region
    _
  $region29: #{widedeep_forward.1} parent=0 // pred_fallthru
    _
  // Predicated region
  $region30: #{widedeep_forward.1} parent=0 // pred_check
    _
  $region31: #{widedeep_forward.1} parent=0 // pred_check_branch
    %31 = sbr.rel (0) target = $region33
  $region32: #{widedeep_forward.1} parent=0 // pred_region
    _
  $region33: #{widedeep_forward.1} parent=0 // pred_fallthru
    _
  %v32 = vld [vmem:[%s1] sm:$0xff]
  %v33 = vld [vmem:[%s1 + $0x8] sm:$0xff]
  %v34 = vld [vmem:[%s1 + $0x10] sm:$0xff]
  %v35 = vld [vmem:[%s1 + $0x18] sm:$0xff]
  %v36 = vld [vmem:[%s1 + $0x20] sm:$0x1]
  %v37 = vld [vmem:[%s0] sm:$0xff]
  %v38 = vld [vmem:[%s0 + $0x8] sm:$0xff]
  %v39 = vld [vmem:[%s0 + $0x10] sm:$0xff]
  %v40 = vld [vmem:[%s0 + $0x18] sm:$0xff]
  %v41 = vld [vmem:[%s0 + $0x20] sm:$0xff]
  %v42 = vld [vmem:[%s0 + $0x28] sm:$0xff]
  %v43 = vld [vmem:[%s0 + $0x30] sm:$0xff]
  %v44 = vld [vmem:[%s0 + $0x38] sm:$0xff]
  %v45 = vld [vmem:[%s0 + $0x40] sm:$0xff]
  %v46 = vld [vmem:[%s0 + $0x48] sm:$0xff]
  %v47 = vld [vmem:[%s0 + $0x50] sm:$0xff]
  %v48 = vld [vmem:[%s0 + $0x58] sm:$0xff]
  %v49 = vld [vmem:[%s0 + $0x60] sm:$0xff]
  %v50 = vld [vmem:[%s0 + $0x68] sm:$0xff]
  %v51 = vld [vmem:[%s0 + $0x70] sm:$0xff]
  %v52 = vld [vmem:[%s0 + $0x78] sm:$0xff]
  %vm53 = vcmask 523264
  %v55 = vsel %vm53, %v32, 0
  %v58 = vsel %vm53, %v33, 0
  %v61 = vsel %vm53, %v34, 0
  %v64 = vsel %vm53, %v35, 0
  %v67 = vsel %vm53, %v36, 0
  %69 = vmatprep.subr.mxu0 0.0
  %70 = vmatpush1.msra.mxu0 0.0
  %71 = vmatprep.subr.mxu0 0.0
  %72 = vmatpush1.msra.mxu0 0.0
  %73 = vmatprep.subr.mxu0 0.0
  %74 = vmatpush1.msra.mxu0 0.0
  %75 = vmatprep.subr.mxu0 0.0
  %76 = vmatpush1.msra.mxu0 0.0
  %77 = vmatprep.subr.mxu0 0.0
  %78 = vmatpush1.msra.mxu0 0.0
  %79 = vmatprep.subr.mxu0 0.0
  %80 = vmatpush1.msra.mxu0 0.0
  %81 = vmatprep.subr.mxu0 0.0
  %82 = vmatpush1.msra.mxu0 0.0
  %83 = vmatprep.subr.mxu0 0.0
  %84 = vmatpush1.msra.mxu0 0.0
  %85 = vmatprep.subr.mxu0 %v52
  %86 = vmatpush1.msra.mxu0 %v51
  %87 = vmatprep.subr.mxu0 %v50
  %88 = vmatpush1.msra.mxu0 %v49
  %89 = vmatprep.subr.mxu0 %v48
  %90 = vmatpush1.msra.mxu0 %v47
  %91 = vmatprep.subr.mxu0 %v46
  %92 = vmatpush1.msra.mxu0 %v45
  %93 = vmatprep.subr.mxu0 %v44
  %94 = vmatpush1.msra.mxu0 %v43
  %95 = vmatprep.subr.mxu0 %v42
  %96 = vmatpush1.msra.mxu0 %v41
  %97 = vmatprep.subr.mxu0 %v40
  %98 = vmatpush1.msra.mxu0 %v39
  %99 = vmatprep.subr.mxu0 %v38
  %100 = vmatpush1.msra.mxu0 %v37
  %101 = vmatprep.subr.mxu0 0.0
  %102 = vmatpush2.msra.mxu0 0.0
  %103 = vmatprep.subr.mxu0 0.0
  %104 = vmatpush2.msra.mxu0 0.0
  %105 = vmatprep.subr.mxu0 0.0
  %106 = vmatpush2.msra.mxu0 0.0
  %107 = vmatprep.subr.mxu0 0.0
  %108 = vmatpush2.msra.mxu0 0.0
  %109 = vmatprep.subr.mxu0 0.0
  %110 = vmatpush2.msra.mxu0 0.0
  %111 = vmatprep.subr.mxu0 0.0
  %112 = vmatpush2.msra.mxu0 0.0
  %113 = vmatprep.subr.mxu0 0.0
  %114 = vmatpush2.msra.mxu0 0.0
  %115 = vmatprep.subr.mxu0 0.0
  %116 = vmatpush2.msra.mxu0 0.0
  %117 = vmatprep.subr.mxu0 0.0
  %118 = vmatpush2.msra.mxu0 0.0
  %119 = vmatprep.subr.mxu0 0.0
  %120 = vmatpush2.msra.mxu0 0.0
  %121 = vmatprep.subr.mxu0 0.0
  %122 = vmatpush2.msra.mxu0 0.0
  %123 = vmatprep.subr.mxu0 0.0
  %124 = vmatpush2.msra.mxu0 0.0
  %125 = vmatprep.subr.mxu0 0.0
  %126 = vmatpush2.msra.mxu0 0.0
  %127 = vmatprep.subr.mxu0 0.0
  %128 = vmatpush2.msra.mxu0 0.0
  %129 = vmatprep.subr.mxu0 0.0
  %130 = vmatpush2.msra.mxu0 0.0
  %131 = vmatprep.subr.mxu0 0.0
  %132 = vmatpush2.msra.mxu0 0.0
  %133 = vmatprep.mubr.f32.mxu0 0.0
  %134 = vmatmul.mubr.f32.gmra.mxu0 %v55
  %v135 = vpop.f32.mrf.mxu0
  %v136 = vadd.f32 0.0, %v135
  %v137 = vpop.f32.mrf.mxu0
  %v138 = vadd.f32 0.0, %v137
  %139 = vmatprep.mubr.f32.mxu0 0.0
  %140 = vmatmul.mubr.f32.gmra.mxu0 %v58
  %v141 = vpop.f32.mrf.mxu0
  %v142 = vadd.f32 0.0, %v141
  %v143 = vpop.f32.mrf.mxu0
  %v144 = vadd.f32 0.0, %v143
  %145 = vmatprep.mubr.f32.mxu0 0.0
  %146 = vmatmul.mubr.f32.gmra.mxu0 %v61
  %v147 = vpop.f32.mrf.mxu0
  %v148 = vadd.f32 0.0, %v147
  %v149 = vpop.f32.mrf.mxu0
  %v150 = vadd.f32 0.0, %v149
  %151 = vmatprep.mubr.f32.mxu0 0.0
  %152 = vmatmul.mubr.f32.gmra.mxu0 %v64
  %v153 = vpop.f32.mrf.mxu0
  %v154 = vadd.f32 0.0, %v153
  %v155 = vpop.f32.mrf.mxu0
  %v156 = vadd.f32 0.0, %v155
  %157 = vmatprep.mubr.f32.mxu0 0.0
  %158 = vmatmul.mubr.f32.gmra.mxu0 %v67
  %v159 = vpop.f32.mrf.mxu0
  %v160 = vadd.f32 0.0, %v159
  %v161 = vpop.f32.mrf.mxu0
  %v162 = vadd.f32 0.0, %v161
  %163 = vdwg.mxu0
  %v164 = vld [vmem:[%s2] sm:$0xff]
  %v165 = vld [vmem:[%s2 + $0x8] sm:$0xff]
  %v166 = vld [vmem:[%s2 + $0x10] sm:$0xff]
  %v167 = vld [vmem:[%s2 + $0x18] sm:$0xff]
  %169 = vset.pattern.permute.xlu0 0
  %170 = vperm.xlu0 %169, %v164
  %v171 = vpop.permute.xlu0 %170
  %174 = vset.pattern.permute.xlu0 0
  %175 = vperm.xlu0 %174, %v165
  %v176 = vpop.permute.xlu0 %175
  %179 = vset.pattern.permute.xlu0 0
  %180 = vperm.xlu0 %179, %v166
  %v181 = vpop.permute.xlu0 %180
  %184 = vset.pattern.permute.xlu0 0
  %185 = vperm.xlu0 %184, %v167
  %v186 = vpop.permute.xlu0 %185
  %v188 = vadd.f32 %v136, %v171
  %v189 = vadd.f32 %v138, %v171
  %v190 = vadd.f32 %v142, %v176
  %v191 = vadd.f32 %v144, %v176
  %v192 = vadd.f32 %v148, %v181
  %v193 = vadd.f32 %v150, %v181
  %v194 = vadd.f32 %v154, %v186
  %v195 = vadd.f32 %v156, %v186
  %v196 = vld [vmem:[%s3] sm:$0xff]
  %v197 = vld [vmem:[%s3 + $0x8] sm:$0xff]
  %v198 = vld [vmem:[%s4] sm:$0xff]
  %v199 = vld [vmem:[%s4 + $0x8] sm:$0xff]
  %201 = vset.pattern.permute.xlu0 0
  %202 = vperm.xlu0 %201, %v198
  %v203 = vpop.permute.xlu0 %202
  %206 = vset.pattern.permute.xlu0 0
  %207 = vperm.xlu0 %206, %v199
  %v208 = vpop.permute.xlu0 %207
  %vm210 = vcmask 261120
  %v212 = vsel %vm210, %v196, 0
  %v215 = vsel %vm210, %v197, 0
  %217 = vmatprep.subr.mxu0 0.0
  %218 = vmatpush1.msra.mxu0 0.0
  %219 = vmatprep.subr.mxu0 0.0
  %220 = vmatpush1.msra.mxu0 0.0
  %221 = vmatprep.subr.mxu0 0.0
  %222 = vmatpush1.msra.mxu0 0.0
  %223 = vmatprep.subr.mxu0 0.0
  %224 = vmatpush1.msra.mxu0 0.0
  %225 = vmatprep.subr.mxu0 0.0
  %226 = vmatpush1.msra.mxu0 0.0
  %227 = vmatprep.subr.mxu0 0.0
  %228 = vmatpush1.msra.mxu0 0.0
  %229 = vmatprep.subr.mxu0 0.0
  %230 = vmatpush1.msra.mxu0 0.0
  %231 = vmatprep.subr.mxu0 0.0
  %232 = vmatpush1.msra.mxu0 0.0
  %233 = vmatprep.subr.mxu0 0.0
  %234 = vmatpush1.msra.mxu0 0.0
  %235 = vmatprep.subr.mxu0 0.0
  %236 = vmatpush1.msra.mxu0 0.0
  %237 = vmatprep.subr.mxu0 0.0
  %238 = vmatpush1.msra.mxu0 0.0
  %239 = vmatprep.subr.mxu0 0.0
  %240 = vmatpush1.msra.mxu0 0.0
  %241 = vmatprep.subr.mxu0 %v195
  %242 = vmatpush1.msra.mxu0 %v194
  %243 = vmatprep.subr.mxu0 %v193
  %244 = vmatpush1.msra.mxu0 %v192
  %245 = vmatprep.subr.mxu0 %v191
  %246 = vmatpush1.msra.mxu0 %v190
  %247 = vmatprep.subr.mxu0 %v189
  %248 = vmatpush1.msra.mxu0 %v188
  %249 = vmatprep.subr.mxu0 0.0
  %250 = vmatpush2.msra.mxu0 0.0
  %251 = vmatprep.subr.mxu0 0.0
  %252 = vmatpush2.msra.mxu0 0.0
  %253 = vmatprep.subr.mxu0 0.0
  %254 = vmatpush2.msra.mxu0 0.0
  %255 = vmatprep.subr.mxu0 0.0
  %256 = vmatpush2.msra.mxu0 0.0
  %257 = vmatprep.subr.mxu0 0.0
  %258 = vmatpush2.msra.mxu0 0.0
  %259 = vmatprep.subr.mxu0 0.0
  %260 = vmatpush2.msra.mxu0 0.0
  %261 = vmatprep.subr.mxu0 0.0
  %262 = vmatpush2.msra.mxu0 0.0
  %263 = vmatprep.subr.mxu0 0.0
  %264 = vmatpush2.msra.mxu0 0.0
  %265 = vmatprep.subr.mxu0 0.0
  %266 = vmatpush2.msra.mxu0 0.0
  %267 = vmatprep.subr.mxu0 0.0
  %268 = vmatpush2.msra.mxu0 0.0
  %269 = vmatprep.subr.mxu0 0.0
  %270 = vmatpush2.msra.mxu0 0.0
  %271 = vmatprep.subr.mxu0 0.0
  %272 = vmatpush2.msra.mxu0 0.0
  %273 = vmatprep.subr.mxu0 0.0
  %274 = vmatpush2.msra.mxu0 0.0
  %275 = vmatprep.subr.mxu0 0.0
  %276 = vmatpush2.msra.mxu0 0.0
  %277 = vmatprep.subr.mxu0 0.0
  %278 = vmatpush2.msra.mxu0 0.0
  %279 = vmatprep.subr.mxu0 0.0
  %280 = vmatpush2.msra.mxu0 0.0
  %281 = vmatprep.mubr.f32.mxu0 0.0
  %282 = vmatmul.mubr.f32.gmra.mxu0 %v212
  %v283 = vpop.f32.mrf.mxu0
  %v284 = vadd.f32 %v203, %v283
  %v285 = vpop.f32.mrf.mxu0
  %v286 = vadd.f32 %v203, %v285
  %287 = vmatprep.mubr.f32.mxu0 0.0
  %288 = vmatmul.mubr.f32.gmra.mxu0 %v215
  %v289 = vpop.f32.mrf.mxu0
  %v290 = vadd.f32 %v208, %v289
  %v291 = vpop.f32.mrf.mxu0
  %v292 = vadd.f32 %v208, %v291
  %293 = vdwg.mxu0
  %v294 = vmax.f32 %v284, 0.0
  %v295 = vmax.f32 %v286, 0.0
  %v296 = vmax.f32 %v290, 0.0
  %v297 = vmax.f32 %v292, 0.0
  %v298 = vld [vmem:[%s5] sm:$0x1]
  %v299 = vld [vmem:[#allocation2] sm:$0x1]
  %301 = vset.pattern.permute.xlu0 0
  %302 = vperm.xlu0 %301, %v299
  %v303 = vpop.permute.xlu0 %302
  %v305 = vlaneseq
  %v306 = vshrl.u32 %v305, 7
  %v307 = vsub.s32 0, %v306
  %v308 = vrot.slane %v303, %v307
  %vm309 = vcmask 130048
  %v311 = vsel %vm309, %v298, 0
  %313 = vmatprep.subr.mxu0 0.0
  %314 = vmatpush1.msra.mxu0 0.0
  %315 = vmatprep.subr.mxu0 0.0
  %316 = vmatpush1.msra.mxu0 0.0
  %317 = vmatprep.subr.mxu0 0.0
  %318 = vmatpush1.msra.mxu0 0.0
  %319 = vmatprep.subr.mxu0 0.0
  %320 = vmatpush1.msra.mxu0 0.0
  %321 = vmatprep.subr.mxu0 0.0
  %322 = vmatpush1.msra.mxu0 0.0
  %323 = vmatprep.subr.mxu0 0.0
  %324 = vmatpush1.msra.mxu0 0.0
  %325 = vmatprep.subr.mxu0 0.0
  %326 = vmatpush1.msra.mxu0 0.0
  %327 = vmatprep.subr.mxu0 0.0
  %328 = vmatpush1.msra.mxu0 0.0
  %329 = vmatprep.subr.mxu0 0.0
  %330 = vmatpush1.msra.mxu0 0.0
  %331 = vmatprep.subr.mxu0 0.0
  %332 = vmatpush1.msra.mxu0 0.0
  %333 = vmatprep.subr.mxu0 0.0
  %334 = vmatpush1.msra.mxu0 0.0
  %335 = vmatprep.subr.mxu0 0.0
  %336 = vmatpush1.msra.mxu0 0.0
  %337 = vmatprep.subr.mxu0 0.0
  %338 = vmatpush1.msra.mxu0 0.0
  %339 = vmatprep.subr.mxu0 0.0
  %340 = vmatpush1.msra.mxu0 0.0
  %341 = vmatprep.subr.mxu0 %v297
  %342 = vmatpush1.msra.mxu0 %v296
  %343 = vmatprep.subr.mxu0 %v295
  %344 = vmatpush1.msra.mxu0 %v294
  %345 = vmatprep.subr.mxu0 0.0
  %346 = vmatpush2.msra.mxu0 0.0
  %347 = vmatprep.subr.mxu0 0.0
  %348 = vmatpush2.msra.mxu0 0.0
  %349 = vmatprep.subr.mxu0 0.0
  %350 = vmatpush2.msra.mxu0 0.0
  %351 = vmatprep.subr.mxu0 0.0
  %352 = vmatpush2.msra.mxu0 0.0
  %353 = vmatprep.subr.mxu0 0.0
  %354 = vmatpush2.msra.mxu0 0.0
  %355 = vmatprep.subr.mxu0 0.0
  %356 = vmatpush2.msra.mxu0 0.0
  %357 = vmatprep.subr.mxu0 0.0
  %358 = vmatpush2.msra.mxu0 0.0
  %359 = vmatprep.subr.mxu0 0.0
  %360 = vmatpush2.msra.mxu0 0.0
  %361 = vmatprep.subr.mxu0 0.0
  %362 = vmatpush2.msra.mxu0 0.0
  %363 = vmatprep.subr.mxu0 0.0
  %364 = vmatpush2.msra.mxu0 0.0
  %365 = vmatprep.subr.mxu0 0.0
  %366 = vmatpush2.msra.mxu0 0.0
  %367 = vmatprep.subr.mxu0 0.0
  %368 = vmatpush2.msra.mxu0 0.0
  %369 = vmatprep.subr.mxu0 0.0
  %370 = vmatpush2.msra.mxu0 0.0
  %371 = vmatprep.subr.mxu0 0.0
  %372 = vmatpush2.msra.mxu0 0.0
  %373 = vmatprep.subr.mxu0 0.0
  %374 = vmatpush2.msra.mxu0 0.0
  %375 = vmatprep.subr.mxu0 0.0
  %376 = vmatpush2.msra.mxu0 0.0
  %377 = vmatprep.mubr.f32.mxu0 0.0
  %378 = vmatmul.mubr.f32.gmra.mxu0 %v311
  %v379 = vpop.f32.mrf.mxu0
  %v380 = vadd.f32 %v308, %v379
  %v381 = vpop.f32.mrf.mxu0
  %v382 = vadd.f32 %v308, %v381
  %383 = vdwg.mxu0
  %v384 = vmax.f32 %v380, 0.0
  %v385 = vmax.f32 %v382, 0.0
  %s386 = sld [smem:[#allocation3]]
  %v387 = vstv %s386
  %v388 = vmul.f32 %v387, %v384
  %v389 = vmul.f32 %v387, %v385
  %v390 = vadd.f32 %v160, %v388
  %v391 = vadd.f32 %v162, %v389
  %v392 = vxor.u32 %v390, 2147483648
  %v393 = vxor.u32 %v391, 2147483648
  %v394 = vmul.f32 %v392, 1.442695
  %v395 = vpow.pop %v394
  %v396 = vmul.f32 %v393, 1.442695
  %v397 = vpow.pop %v396
  %v398 = vadd.f32 %v395, 1.0
  %v399 = vadd.f32 %v397, 1.0
  %v400 = vrcp.pop %v398
  %v401 = vmul.f32 1.0, %v400
  %v402 = vrcp.pop %v399
  %v403 = vmul.f32 1.0, %v402
  %v406 = vcombine.low %v401, %v403
  %v408 = vunpack.c.l.s4 1966171168
  %v409 = vunpack.c.0.s8 %v408
  %v410 = vlaneseq
  %v411 = vshrl.u32 %v410, 7
  %v412 = vsub.s32 %v409, %v411
  %v413 = vrot.slane %v406, %v412
  %v415 = vunpack.c.l.s4 1966171168
  %v416 = vunpack.c.0.s8 %v415
  %v417 = vlaneseq
  %v418 = vshrl.u32 %v417, 7
  %v419 = vsub.s32 %v416, %v418
  %v420 = vrot.slane %v413, %v419
  %v422 = vlaneseq
  %vm423 = vcmp.ge.s32.totalorder %v422, 0
  %vm424 = vcmp.lt.s32.totalorder %v422, 256
  %vm425 = vmand %vm423, %vm424
  %426 = vst.msk [vmem:[%s8] sm:$0x3] %vm425, %v420
  // Predicated region
  $region34: #{widedeep_forward.1} parent=0 // pred_check
    _
  $region35: #{widedeep_forward.1} parent=0 // pred_check_branch
    %428 = sbr.rel (0) target = $region37
  $region36: #{widedeep_forward.1} parent=0 // pred_region
    _
  $region37: #{widedeep_forward.1} parent=0 // pred_fallthru
    _
  // Predicated region
  $region38: #{widedeep_forward.1} parent=0 // pred_check
    _
  $region39: #{widedeep_forward.1} parent=0 // pred_check_branch
    %430 = sbr.rel (0) target = $region41
  $region40: #{widedeep_forward.1} parent=0 // pred_region
    _
  $region41: #{widedeep_forward.1} parent=0 // pred_fallthru
    _

</llo_original>
